<compile_context>
chip_gen: v7x
topology: tpu7x:2x2x1
jax: 0.10.0
libtpu: 0.0.40
codegen_flags: <defaults>
</compile_context>

<pallas_src>
from functools import partial

import jax
import jax.numpy as jnp
from jax.experimental import pallas as pl
from jax.experimental.pallas import tpu as pltpu


def _round_up(a, b):
    return (a + b - 1) // b * b


def _gelu_exact(x):
    # exact (erf-based) GELU, matching torch.nn.GELU() default
    return 0.5 * x * (1.0 + jax.lax.erf(x * 0.7071067811865476))


def _head_kernel(x_ref,
                 w1_ref, b1_ref,          # fused first layers (attention + branches)
                 wa2_ref, ba2_ref,        # attention second layer (padded to NBP)
                 w2bd_ref, bb2_ref,       # block-diagonal branch second layers
                 wpred_ref, bw_ref,
                 *, hp):
    x = x_ref[...]                                                   # (tb, D) bf16

    # -------- fused first-layer matmul (attention + all branches) ----------
    h = jnp.dot(x, w1_ref[...], preferred_element_type=jnp.float32) + b1_ref[...]
    h = _gelu_exact(h)                                               # f32 (tb, HP+BHP)
    h_bf = h.astype(jnp.bfloat16)
    h_a = h_bf[:, :hp]                                               # (tb, HP)  lane-aligned split
    h_b = h_bf[:, hp:]                                               # (tb, BHP)

    # -------- attention head: Linear -> Softmax ----------------------------
    logits = jnp.dot(h_a, wa2_ref[...],
                     preferred_element_type=jnp.float32) + ba2_ref[...]   # (tb, NBP)
    logits = logits - jnp.max(logits, axis=1, keepdims=True)
    e = jnp.exp(logits)
    inv = pl.reciprocal(jnp.sum(e, axis=1, keepdims=True), approx=True)
    bw = e * inv                                                     # (tb, NBP); padded cols ~0

    # -------- branch second layers: single MXU dot vs block-diag selector --
    preds = jnp.dot(h_b, w2bd_ref[...],
                    preferred_element_type=jnp.float32) + bb2_ref[...]    # (tb, NBP)

    wpred = jnp.sum(preds * bw, axis=1, keepdims=True)               # (tb, 1)
    wpred_ref[...] = jnp.broadcast_to(wpred, wpred_ref.shape)        # lane-dense store
    bw_ref[...] = bw


def multi_branch_regression_head(x, params, *, num_branches, hidden, block_b=256):
    B, D = x.shape
    NB, H = num_branches, hidden
    BH = NB * H

    HP = _round_up(H, 128)          # padded attention-hidden width
    BHP = _round_up(BH, 128)        # padded fused branch-hidden width
    NBP = _round_up(NB, 128)        # padded branch count (lane-dense outputs)

    f32, bf16 = jnp.float32, jnp.bfloat16

    # -------------------- host-side weight prep (layout plumbing) ----------
    wa1, ba1 = params["wa1"], params["ba1"]
    wb1, bb1 = params["wb1"], params["bb1"]
    wa2, ba2 = params["wa2"], params["ba2"]
    wb2, bb2 = params["wb2"], params["bb2"]

    # fused first layer: [attention | branches], zero-padded to lane multiples
    w1_fused = jnp.zeros((D, HP + BHP), f32)
    w1_fused = w1_fused.at[:, :H].set(wa1)
    w1_fused = w1_fused.at[:, HP:HP + BH].set(wb1)
    b1_fused = jnp.zeros((1, HP + BHP), f32)
    b1_fused = b1_fused.at[:, :H].set(ba1)
    b1_fused = b1_fused.at[:, HP:HP + BH].set(bb1)

    # attention second layer padded to NBP; padded logits get a -inf-like bias
    wa2_p = jnp.zeros((HP, NBP), f32).at[:H, :NB].set(wa2)
    ba2_p = jnp.full((1, NBP), -1e30, f32).at[:, :NB].set(ba2)

    # block-diagonal selector for the NB per-branch second layers
    w2bd = jnp.zeros((BHP, NBP), f32)
    for n in range(NB):
        w2bd = w2bd.at[n * H:(n + 1) * H, n].set(wb2[n])
    bb2_p = jnp.zeros((1, NBP), f32).at[:, :NB].set(bb2)

    # -------------------- batch tiling --------------------------------------
    tb = _round_up(min(block_b, _round_up(B, 8)), 8)
    BP = _round_up(B, tb)
    x_p = jnp.zeros((BP, D), f32).at[:B].set(x)

    # bf16 for MXU operands, f32 for biases / accumulation
    x_bf = x_p.astype(bf16)
    w1_bf = w1_fused.astype(bf16)
    wa2_bf = wa2_p.astype(bf16)
    w2bd_bf = w2bd.astype(bf16)

    grid = (BP // tb,)
    kernel = partial(_head_kernel, hp=HP)

    flops = int(2 * BP * D * (HP + BHP) + 2 * BP * HP * NBP + 2 * BP * BHP * NBP)
    transcendentals = int(BP * (HP + BHP + NBP))
    bytes_accessed = int(
        BP * D * 2
        + (D * (HP + BHP) + HP * NBP + BHP * NBP) * 2
        + (HP + BHP + 2 * NBP) * 4
        + (BP * 128 + BP * NBP) * 4
    )

    wpred_p, bw_p = pl.pallas_call(
        kernel,
        out_shape=(
            jax.ShapeDtypeStruct((BP, 128), f32),
            jax.ShapeDtypeStruct((BP, NBP), f32),
        ),
        grid_spec=pltpu.PrefetchScalarGridSpec(
            num_scalar_prefetch=0,
            grid=grid,
            in_specs=[
                pl.BlockSpec((tb, D), lambda i: (i, 0)),          # x: streamed over B
                pl.BlockSpec((D, HP + BHP), lambda i: (0, 0)),    # resident weights
                pl.BlockSpec((1, HP + BHP), lambda i: (0, 0)),
                pl.BlockSpec((HP, NBP), lambda i: (0, 0)),
                pl.BlockSpec((1, NBP), lambda i: (0, 0)),
                pl.BlockSpec((BHP, NBP), lambda i: (0, 0)),
                pl.BlockSpec((1, NBP), lambda i: (0, 0)),
            ],
            out_specs=[
                pl.BlockSpec((tb, 128), lambda i: (i, 0)),        # lane-dense wpred block
                pl.BlockSpec((tb, NBP), lambda i: (i, 0)),        # lane-dense branch weights
            ],
        ),
        compiler_params=pltpu.CompilerParams(
            dimension_semantics=("parallel",),
            vmem_limit_bytes=48 * 1024 * 1024,
        ),
        cost_estimate=pl.CostEstimate(
            flops=flops,
            transcendentals=transcendentals,
            bytes_accessed=bytes_accessed,
        ),
    )(x_bf, w1_bf, b1_fused, wa2_bf, ba2_p, w2bd_bf, bb2_p)

    return wpred_p[:B, :1], bw_p[:B, :NB]


def _reference(x, params, *, num_branches, hidden):
    # pure-JAX f32 reference for sanity checking
    def gelu(v):
        return 0.5 * v * (1.0 + jax.lax.erf(v / jnp.sqrt(2.0)))

    x = x.astype(jnp.float32)
    h_a = gelu(x @ params["wa1"] + params["ba1"])
    logits = h_a @ params["wa2"] + params["ba2"]
    w = jax.nn.softmax(logits, axis=1)
    h_b = gelu(x @ params["wb1"] + params["bb1"])          # (B, NB*H)
    h_b = h_b.reshape(x.shape[0], num_branches, hidden)
    preds = jnp.einsum("bnh,nh->bn", h_b, params["wb2"]) + params["bb2"]
    wpred = jnp.sum(preds * w, axis=1, keepdims=True)
    return wpred, w


def make_params(key, input_dim, num_branches):
    hidden = input_dim // 2
    ks = jax.random.split(key, 8)
    scale1 = 1.0 / jnp.sqrt(input_dim)
    scale2 = 1.0 / jnp.sqrt(hidden)
    return {
        # per-branch first layers fused: (D, NB*H)
        "wb1": jax.random.normal(ks[0], (input_dim, num_branches * hidden), jnp.float32) * scale1,
        "bb1": jax.random.normal(ks[1], (1, num_branches * hidden), jnp.float32) * 0.01,
        # per-branch second layers: (NB, H) -> scalar per branch
        "wb2": jax.random.normal(ks[2], (num_branches, hidden), jnp.float32) * scale2,
        "bb2": jax.random.normal(ks[3], (1, num_branches), jnp.float32) * 0.01,
        # attention head
        "wa1": jax.random.normal(ks[4], (input_dim, hidden), jnp.float32) * scale1,
        "ba1": jax.random.normal(ks[5], (1, hidden), jnp.float32) * 0.01,
        "wa2": jax.random.normal(ks[6], (hidden, num_branches), jnp.float32) * scale2,
        "ba2": jax.random.normal(ks[7], (1, num_branches), jnp.float32) * 0.01,
    }


if __name__ == "__main__":
    B, D, NB = 8, 32, 8
    H = D // 2

    key = jax.random.PRNGKey(0)
    kx, kp = jax.random.split(key)
    x = jax.random.normal(kx, (B, D), jnp.float32)
    params = make_params(kp, D, NB)

    wpred, bw = multi_branch_regression_head(x, params, num_branches=NB, hidden=H)
    jax.block_until_ready((wpred, bw))

    wpred_ref, bw_ref = _reference(x, params, num_branches=NB, hidden=H)
    assert wpred.shape == (B, 1) and bw.shape == (B, NB)
    # bf16 MXU operands (f32 accumulation) -> loosened tolerances vs f32 reference
    assert jnp.allclose(wpred, wpred_ref, atol=5e-2, rtol=5e-2)
    assert jnp.allclose(bw, bw_ref, atol=2e-2, rtol=5e-2)

    print("KERNEL_OK")
</pallas_src>

<mosaic_0001>
module attributes {stable_mosaic.version = 11 : i64} {
  func.func @_head_kernel(%arg0: i32, %arg1: memref<8x32xbf16, #tpu.memory_space<vmem>>, %arg2: memref<32x256xbf16, #tpu.memory_space<vmem>>, %arg3: memref<1x256xf32, #tpu.memory_space<vmem>>, %arg4: memref<128x128xbf16, #tpu.memory_space<vmem>>, %arg5: memref<1x128xf32, #tpu.memory_space<vmem>>, %arg6: memref<128x128xbf16, #tpu.memory_space<vmem>>, %arg7: memref<1x128xf32, #tpu.memory_space<vmem>>, %arg8: memref<8x128xf32, #tpu.memory_space<vmem>>, %arg9: memref<8x128xf32, #tpu.memory_space<vmem>>) attributes {dimension_semantics = [#tpu.dimension_semantics<parallel>], iteration_bounds = array<i64: 1>, scalar_prefetch = 0 : i64, scratch_operands = 0 : i64, tpu.core_type = #tpu.core_type<tc>, window_params = [{transform_indices = @transform_0, window_bounds = array<i64: 8, 32>}, {pipeline_mode = #tpu.pipeline_mode<synchronous>, transform_indices = @transform_1, window_bounds = array<i64: 32, 256>}, {pipeline_mode = #tpu.pipeline_mode<synchronous>, transform_indices = @transform_2, window_bounds = array<i64: 1, 256>}, {pipeline_mode = #tpu.pipeline_mode<synchronous>, transform_indices = @transform_3, window_bounds = array<i64: 128, 128>}, {pipeline_mode = #tpu.pipeline_mode<synchronous>, transform_indices = @transform_4, window_bounds = array<i64: 1, 128>}, {pipeline_mode = #tpu.pipeline_mode<synchronous>, transform_indices = @transform_5, window_bounds = array<i64: 128, 128>}, {pipeline_mode = #tpu.pipeline_mode<synchronous>, transform_indices = @transform_6, window_bounds = array<i64: 1, 128>}, {transform_indices = @transform_7, window_bounds = array<i64: 8, 128>}, {transform_indices = @transform_8, window_bounds = array<i64: 8, 128>}]} {
    %c0 = arith.constant 0 : index
    %c0_0 = arith.constant 0 : index
    %0 = vector.load %arg1[%c0, %c0_0] : memref<8x32xbf16, #tpu.memory_space<vmem>>, vector<8x32xbf16>
    %c0_1 = arith.constant 0 : index
    %c0_2 = arith.constant 0 : index
    %1 = vector.load %arg2[%c0_1, %c0_2] : memref<32x256xbf16, #tpu.memory_space<vmem>>, vector<32x256xbf16>
    %cst = arith.constant dense<0.000000e+00> : vector<8x256xf32>
    %2 = tpu.matmul %0, %1, %cst {dimension_numbers = #tpu.dot_dimension_numbers<[1], [0], [0], [1], [0, 0, 1, 1], [], []>} : vector<8x32xbf16>, vector<32x256xbf16>, vector<8x256xf32> -> vector<8x256xf32>
    %c0_3 = arith.constant 0 : index
    %c0_4 = arith.constant 0 : index
    %3 = vector.load %arg3[%c0_3, %c0_4] : memref<1x256xf32, #tpu.memory_space<vmem>>, vector<1x256xf32>
    %4 = vector.broadcast %3 : vector<1x256xf32> to vector<8x256xf32>
    %5 = arith.addf %2, %4 : vector<8x256xf32>
    %cst_5 = arith.constant 5.000000e-01 : f32
    %6 = vector.broadcast %cst_5 : f32 to vector<8x256xf32>
    %7 = arith.mulf %6, %5 : vector<8x256xf32>
    %cst_6 = arith.constant 0.707106769 : f32
    %8 = vector.broadcast %cst_6 : f32 to vector<8x256xf32>
    %9 = arith.mulf %5, %8 : vector<8x256xf32>
    %10 = math.erf %9 : vector<8x256xf32>
    %cst_7 = arith.constant 1.000000e+00 : f32
    %11 = vector.broadcast %cst_7 : f32 to vector<8x256xf32>
    %12 = arith.addf %11, %10 : vector<8x256xf32>
    %13 = arith.mulf %7, %12 : vector<8x256xf32>
    %14 = arith.truncf %13 : vector<8x256xf32> to vector<8x256xbf16>
    %15 = vector.extract_strided_slice %14 {offsets = [0, 0], sizes = [8, 128], strides = [1, 1]} : vector<8x256xbf16> to vector<8x128xbf16>
    %16 = vector.extract_strided_slice %14 {offsets = [0, 128], sizes = [8, 128], strides = [1, 1]} : vector<8x256xbf16> to vector<8x128xbf16>
    %c0_8 = arith.constant 0 : index
    %c0_9 = arith.constant 0 : index
    %17 = vector.load %arg4[%c0_8, %c0_9] : memref<128x128xbf16, #tpu.memory_space<vmem>>, vector<128x128xbf16>
    %cst_10 = arith.constant dense<0.000000e+00> : vector<8x128xf32>
    %18 = tpu.matmul %15, %17, %cst_10 {dimension_numbers = #tpu.dot_dimension_numbers<[1], [0], [0], [1], [0, 0, 1, 1], [], []>} : vector<8x128xbf16>, vector<128x128xbf16>, vector<8x128xf32> -> vector<8x128xf32>
    %c0_11 = arith.constant 0 : index
    %c0_12 = arith.constant 0 : index
    %19 = vector.load %arg5[%c0_11, %c0_12] : memref<1x128xf32, #tpu.memory_space<vmem>>, vector<1x128xf32>
    %20 = vector.broadcast %19 : vector<1x128xf32> to vector<8x128xf32>
    %21 = arith.addf %18, %20 : vector<8x128xf32>
    %cst_13 = arith.constant dense<0xFF800000> : vector<8xf32>
    %22 = vector.multi_reduction <maximumf>, %21, %cst_13 [1] : vector<8x128xf32> to vector<8xf32>
    %23 = vector.shape_cast %22 : vector<8xf32> to vector<8x1xf32>
    %24 = vector.broadcast %23 : vector<8x1xf32> to vector<8x128xf32>
    %25 = arith.subf %21, %24 : vector<8x128xf32>
    %26 = math.exp %25 : vector<8x128xf32>
    %cst_14 = arith.constant dense<0.000000e+00> : vector<8xf32>
    %27 = vector.multi_reduction <add>, %26, %cst_14 [1] : vector<8x128xf32> to vector<8xf32>
    %28 = vector.shape_cast %27 : vector<8xf32> to vector<8x1xf32>
    %29 = tpu.reciprocal %28 {approx = true} : vector<8x1xf32> -> vector<8x1xf32>
    %30 = vector.broadcast %29 : vector<8x1xf32> to vector<8x128xf32>
    %31 = arith.mulf %26, %30 : vector<8x128xf32>
    %c0_15 = arith.constant 0 : index
    %c0_16 = arith.constant 0 : index
    %32 = vector.load %arg6[%c0_15, %c0_16] : memref<128x128xbf16, #tpu.memory_space<vmem>>, vector<128x128xbf16>
    %cst_17 = arith.constant dense<0.000000e+00> : vector<8x128xf32>
    %33 = tpu.matmul %16, %32, %cst_17 {dimension_numbers = #tpu.dot_dimension_numbers<[1], [0], [0], [1], [0, 0, 1, 1], [], []>} : vector<8x128xbf16>, vector<128x128xbf16>, vector<8x128xf32> -> vector<8x128xf32>
    %c0_18 = arith.constant 0 : index
    %c0_19 = arith.constant 0 : index
    %34 = vector.load %arg7[%c0_18, %c0_19] : memref<1x128xf32, #tpu.memory_space<vmem>>, vector<1x128xf32>
    %35 = vector.broadcast %34 : vector<1x128xf32> to vector<8x128xf32>
    %36 = arith.addf %33, %35 : vector<8x128xf32>
    %37 = arith.mulf %36, %31 : vector<8x128xf32>
    %cst_20 = arith.constant dense<0.000000e+00> : vector<8xf32>
    %38 = vector.multi_reduction <add>, %37, %cst_20 [1] : vector<8x128xf32> to vector<8xf32>
    %39 = vector.shape_cast %38 : vector<8xf32> to vector<8x1xf32>
    %40 = vector.shape_cast %39 : vector<8x1xf32> to vector<8x1xf32>
    %41 = vector.broadcast %40 : vector<8x1xf32> to vector<8x128xf32>
    %c0_21 = arith.constant 0 : index
    %c0_22 = arith.constant 0 : index
    %42 = vector.load %arg8[%c0_21, %c0_22] : memref<8x128xf32, #tpu.memory_space<vmem>>, vector<8x128xf32>
    tpu.vector_store %arg8[%c0_21, %c0_22], %41 {strides = array<i32>} : memref<8x128xf32, #tpu.memory_space<vmem>>, vector<8x128xf32>,
    %c0_23 = arith.constant 0 : index
    %c0_24 = arith.constant 0 : index
    %43 = vector.load %arg9[%c0_23, %c0_24] : memref<8x128xf32, #tpu.memory_space<vmem>>, vector<8x128xf32>
    tpu.vector_store %arg9[%c0_23, %c0_24], %31 {strides = array<i32>} : memref<8x128xf32, #tpu.memory_space<vmem>>, vector<8x128xf32>,
    return
  }
  func.func @transform_0(%arg0: i32) -> (i32, i32) {
    %c0_i32 = arith.constant 0 : i32
    %c0_i32_0 = arith.constant 0 : i32
    return %arg0, %c0_i32 : i32, i32
  }
  func.func @transform_1(%arg0: i32) -> (i32, i32) {
    %c0_i32 = arith.constant 0 : i32
    %c0_i32_0 = arith.constant 0 : i32
    %c0_i32_1 = arith.constant 0 : i32
    return %c0_i32, %c0_i32_0 : i32, i32
  }
  func.func @transform_2(%arg0: i32) -> (i32, i32) {
    %c0_i32 = arith.constant 0 : i32
    %c0_i32_0 = arith.constant 0 : i32
    %c0_i32_1 = arith.constant 0 : i32
    return %c0_i32, %c0_i32_0 : i32, i32
  }
  func.func @transform_3(%arg0: i32) -> (i32, i32) {
    %c0_i32 = arith.constant 0 : i32
    %c0_i32_0 = arith.constant 0 : i32
    %c0_i32_1 = arith.constant 0 : i32
    return %c0_i32, %c0_i32_0 : i32, i32
  }
  func.func @transform_4(%arg0: i32) -> (i32, i32) {
    %c0_i32 = arith.constant 0 : i32
    %c0_i32_0 = arith.constant 0 : i32
    %c0_i32_1 = arith.constant 0 : i32
    return %c0_i32, %c0_i32_0 : i32, i32
  }
  func.func @transform_5(%arg0: i32) -> (i32, i32) {
    %c0_i32 = arith.constant 0 : i32
    %c0_i32_0 = arith.constant 0 : i32
    %c0_i32_1 = arith.constant 0 : i32
    return %c0_i32, %c0_i32_0 : i32, i32
  }
  func.func @transform_6(%arg0: i32) -> (i32, i32) {
    %c0_i32 = arith.constant 0 : i32
    %c0_i32_0 = arith.constant 0 : i32
    %c0_i32_1 = arith.constant 0 : i32
    return %c0_i32, %c0_i32_0 : i32, i32
  }
  func.func @transform_7(%arg0: i32) -> (i32, i32) {
    %c0_i32 = arith.constant 0 : i32
    %c0_i32_0 = arith.constant 0 : i32
    return %arg0, %c0_i32 : i32, i32
  }
  func.func @transform_8(%arg0: i32) -> (i32, i32) {
    %c0_i32 = arith.constant 0 : i32
    %c0_i32_0 = arith.constant 0 : i32
    return %arg0, %c0_i32 : i32, i32
  }
}

</mosaic_0001>

<llo_original>
// kernel: tpu_custom_call.1
$region0: #{tpu_custom_call.1}
  #allocation0 [shape = 'u32[]', space=smem, size = 0x4, offset = 0x4, fixed_abs, tag = 'smem constant byte address 0x4 - core index']
  #allocation1 [shape = 'u32[144,128]{1,0:T(1,128)}', space=vmem, size = 0x12000, scoped, tag = 'internal scratch']
  %s0 = inlined_call_operand.hbm [shape: bf16[8,32], index: 0, kind: input, shape index: {}]
  %s1 = inlined_call_operand.hbm [shape: bf16[32,256], index: 1, kind: input, shape index: {}]
  %s2 = inlined_call_operand.vmem [shape: f32[1,256], index: 2, kind: input, shape index: {}]
  %s3 = inlined_call_operand.hbm [shape: bf16[128,128], index: 3, kind: input, shape index: {}]
  %s4 = inlined_call_operand.vmem [shape: f32[1,128], index: 4, kind: input, shape index: {}]
  %s5 = inlined_call_operand.hbm [shape: bf16[128,128], index: 5, kind: input, shape index: {}]
  %s6 = inlined_call_operand.vmem [shape: f32[1,128], index: 6, kind: input, shape index: {}]
  %s7 = inlined_call_operand.hbm [shape: f32[8,128], index: 7, kind: output, shape index: {0}]
  %s8 = inlined_call_operand.hbm [shape: f32[8,128], index: 8, kind: output, shape index: {1}]
  %9 = xla_tuple %s7, %s8
  %s10 = sld [smem:[#allocation0]]
  $region62: #{tpu_custom_call.1} parent=0
    _
  %s12 = ssub.s32 1, %s10
  %s13 = scalar_select 0, %s12, %s10
  $region1: #{tpu_custom_call.1} parent=0
    #allocation2 [shape = 'u8[2048]{0}', space=vmem, size = 0x800, scoped, tag = 'input window, operand 0, single buffered']
    #allocation3 [shape = 's32[1]{0}', space=sflag, size = 0x4, scoped, tag = 'scoped memory for tpu_custom_call.1']
    #allocation4 [shape = 's32[1]{0}', space=sflag, size = 0x4, scoped, tag = 'scoped memory for tpu_custom_call.1']
    #allocation5 [shape = 'u8[16384]{0}', space=vmem, size = 0x4000, scoped, tag = 'input window, operand 1, single buffered']
    #allocation6 [shape = 's32[1]{0}', space=sflag, size = 0x4, scoped, tag = 'scoped memory for tpu_custom_call.1']
    #allocation7 [shape = 'u8[32768]{0}', space=vmem, size = 0x8000, scoped, tag = 'input window, operand 3, single buffered']
    #allocation8 [shape = 'u8[32768]{0}', space=vmem, size = 0x8000, scoped, tag = 'input window, operand 5, single buffered']
    #allocation9 [shape = 's32[1]{0}', space=sflag, size = 0x4, scoped, tag = 'scoped memory for tpu_custom_call.1']
    #allocation10 [shape = 'u8[4096]{0}', space=vmem, size = 0x1000, scoped, tag = 'output window, operand 0, single buffered']
    #allocation11 [shape = 'u8[4096]{0}', space=vmem, size = 0x1000, scoped, tag = 'output window, operand 1, single buffered']
    #allocation12 [shape = 's32[1]{0}', space=sflag, size = 0x4, scoped, tag = 'scoped memory for tpu_custom_call.1']
    %14 = vsyncpa [#allocation3], 0
    %15 = vsyncpa [#allocation6], 0
    %16 = vsyncpa [#allocation9], 0
    %17 = vsyncpa [#allocation4], 0
    %18 = vsyncpa [#allocation12], 0
    // Predicated region
    $region2: #{tpu_custom_call.1} parent=1 // pred_check
      _
    $region3: #{tpu_custom_call.1} parent=1 // pred_check_branch
      %20 = sbr.rel (0) target = $region5
    $region4: #{tpu_custom_call.1} parent=1 // pred_region
      %s22 = ssub.s32 64, 64
      %23 = vsyncadd [#allocation3], %s22
      %s25 = sshll.u32 [#allocation2], 4
      %s26 = int_to_ptr.vmem [resolvable:$true] %s25
      %28 = dma.hbm_to_vmem [thread:$0]  %s0, 64, %s26, [#allocation3]
    $region5: #{tpu_custom_call.1} parent=1 // pred_fallthru
      _
    // Predicated region
    $region6: #{tpu_custom_call.1} parent=1 // pred_check
      _
    $region7: #{tpu_custom_call.1} parent=1 // pred_check_branch
      %30 = sbr.rel (0) target = $region9
    $region8: #{tpu_custom_call.1} parent=1 // pred_region
      %s32 = ssub.s32 512, 512
      %33 = vsyncadd [#allocation6], %s32
      %s34 = sshll.u32 [#allocation5], 4
      %s35 = int_to_ptr.vmem [resolvable:$true] %s34
      %40 = dma.hbm_to_vmem [thread:$0]  %s1, 512, %s35, [#allocation6], 128, 128, 8
    $region9: #{tpu_custom_call.1} parent=1 // pred_fallthru
      _
    // Predicated region
    $region10: #{tpu_custom_call.1} parent=1 // pred_check
      _
    $region11: #{tpu_custom_call.1} parent=1 // pred_check_branch
      %42 = sbr.rel (0) target = $region13
    $region12: #{tpu_custom_call.1} parent=1 // pred_region
      _
    $region13: #{tpu_custom_call.1} parent=1 // pred_fallthru
      _
    // Predicated region
    $region14: #{tpu_custom_call.1} parent=1 // pred_check
      _
    $region15: #{tpu_custom_call.1} parent=1 // pred_check_branch
      %44 = sbr.rel (0) target = $region17
    $region16: #{tpu_custom_call.1} parent=1 // pred_region
      %s46 = ssub.s32 1024, 1024
      %47 = vsyncadd [#allocation6], %s46
      %s48 = sshll.u32 [#allocation7], 4
      %s49 = int_to_ptr.vmem [resolvable:$true] %s48
      %54 = dma.hbm_to_vmem [thread:$0]  %s3, 1024, %s49, [#allocation6], 64, 64, 4
    $region17: #{tpu_custom_call.1} parent=1 // pred_fallthru
      _
    // Predicated region
    $region18: #{tpu_custom_call.1} parent=1 // pred_check
      _
    $region19: #{tpu_custom_call.1} parent=1 // pred_check_branch
      %56 = sbr.rel (0) target = $region21
    $region20: #{tpu_custom_call.1} parent=1 // pred_region
      _
    $region21: #{tpu_custom_call.1} parent=1 // pred_fallthru
      _
    // Predicated region
    $region22: #{tpu_custom_call.1} parent=1 // pred_check
      _
    $region23: #{tpu_custom_call.1} parent=1 // pred_check_branch
      %58 = sbr.rel (0) target = $region25
    $region24: #{tpu_custom_call.1} parent=1 // pred_region
      %s60 = ssub.s32 1024, 1024
      %61 = vsyncadd [#allocation9], %s60
      %s62 = sshll.u32 [#allocation8], 4
      %s63 = int_to_ptr.vmem [resolvable:$true] %s62
      %68 = dma.hbm_to_vmem [thread:$0]  %s5, 1024, %s63, [#allocation9], 64, 64, 4
    $region25: #{tpu_custom_call.1} parent=1 // pred_fallthru
      _
    // Predicated region
    $region26: #{tpu_custom_call.1} parent=1 // pred_check
      _
    $region27: #{tpu_custom_call.1} parent=1 // pred_check_branch
      %70 = sbr.rel (0) target = $region29
    $region28: #{tpu_custom_call.1} parent=1 // pred_region
      _
    $region29: #{tpu_custom_call.1} parent=1 // pred_fallthru
      _
    // Predicated region
    $region30: #{tpu_custom_call.1} parent=1 // pred_check
      _
    $region31: #{tpu_custom_call.1} parent=1 // pred_check_branch
      %72 = sbr.rel (0) target = $region33
    $region32: #{tpu_custom_call.1} parent=1 // pred_region
      %73 = dma.done [#allocation3], 64
    $region33: #{tpu_custom_call.1} parent=1 // pred_fallthru
      _
    // Predicated region
    $region34: #{tpu_custom_call.1} parent=1 // pred_check
      _
    $region35: #{tpu_custom_call.1} parent=1 // pred_check_branch
      %75 = sbr.rel (0) target = $region37
    $region36: #{tpu_custom_call.1} parent=1 // pred_region
      %76 = dma.done [#allocation6], 512
    $region37: #{tpu_custom_call.1} parent=1 // pred_fallthru
      _
    // Predicated region
    $region38: #{tpu_custom_call.1} parent=1 // pred_check
      _
    $region39: #{tpu_custom_call.1} parent=1 // pred_check_branch
      %78 = sbr.rel (0) target = $region41
    $region40: #{tpu_custom_call.1} parent=1 // pred_region
      %79 = dma.done [#allocation6], 1024
    $region41: #{tpu_custom_call.1} parent=1 // pred_fallthru
      _
    // Predicated region
    $region42: #{tpu_custom_call.1} parent=1 // pred_check
      _
    $region43: #{tpu_custom_call.1} parent=1 // pred_check_branch
      %81 = sbr.rel (0) target = $region45
    $region44: #{tpu_custom_call.1} parent=1 // pred_region
      %82 = dma.done [#allocation9], 1024
    $region45: #{tpu_custom_call.1} parent=1 // pred_fallthru
      _
    %v84 = vld [vmem:[#allocation2] sm:$0xf]
    %v85 = vld [vmem:[#allocation5] sm:$0xff]
    %v86 = vld [vmem:[#allocation5 + $0x8] sm:$0xff]
    %v87 = vld [vmem:[#allocation5 + $0x10] sm:$0xff]
    %v88 = vld [vmem:[#allocation5 + $0x18] sm:$0xff]
    %v89 = vld [vmem:[%s2] sm:$0x3]
    %v91 = vlaneseq
    %v92 = vshrl.u32 %v91, 7
    %v93 = vsub.s32 0, %v92
    %v94 = vrot.slane %v89, %v93
    %v95 = vlaneseq
    %v96 = vshrl.u32 %v95, 7
    %v97 = vsub.s32 1, %v96
    %v98 = vrot.slane %v89, %v97
    %v105 = vunpack.c.l.b16 %v85
    %v106 = vunpack.c.h.b16 %v85
    %v107 = vunpack.c.l.b16 %v86
    %v108 = vunpack.c.h.b16 %v86
    %v109 = vunpack.c.l.b16 %v87
    %v110 = vunpack.c.h.b16 %v87
    %v111 = vunpack.c.l.b16 %v88
    %v112 = vunpack.c.h.b16 %v88
    %v113 = vpack.c.b16 %v107, %v105
    %v114 = vpack.c.b16 %v108, %v106
    %v115 = vpack.c.b16 %v111, %v109
    %v116 = vpack.c.b16 %v112, %v110
    %vm121 = vcmask 261120
    %v123 = vsel %vm121, %v84, 0
    %125 = vmatprep.subr.bf16.mxu0 %v114
    %126 = vmatpush1.bf16.msra.mxu0 %v113
    %127 = vmatprep.subr.bf16.mxu0 %v116
    %128 = vmatpush1.bf16.msra.mxu0 %v115
    %129 = vmatprep.subr.bf16.mxu0 0
    %130 = vmatpush1.bf16.msra.mxu0 0
    %131 = vmatprep.subr.bf16.mxu0 0
    %132 = vmatpush1.bf16.msra.mxu0 0
    %133 = vmatprep.subr.bf16.mxu0 0
    %134 = vmatpush1.bf16.msra.mxu0 0
    %135 = vmatprep.subr.bf16.mxu0 0
    %136 = vmatpush1.bf16.msra.mxu0 0
    %137 = vmatprep.subr.bf16.mxu0 0
    %138 = vmatpush1.bf16.msra.mxu0 0
    %139 = vmatprep.subr.bf16.mxu0 0
    %140 = vmatpush1.bf16.msra.mxu0 0
    %141 = vmatprep.subr.bf16.mxu0 0
    %142 = vmatpush1.bf16.msra.mxu0 0
    %143 = vmatprep.subr.bf16.mxu0 0
    %144 = vmatpush1.bf16.msra.mxu0 0
    %145 = vmatprep.subr.bf16.mxu0 0
    %146 = vmatpush1.bf16.msra.mxu0 0
    %147 = vmatprep.subr.bf16.mxu0 0
    %148 = vmatpush1.bf16.msra.mxu0 0
    %149 = vmatprep.subr.bf16.mxu0 0
    %150 = vmatpush1.bf16.msra.mxu0 0
    %151 = vmatprep.subr.bf16.mxu0 0
    %152 = vmatpush1.bf16.msra.mxu0 0
    %153 = vmatprep.subr.bf16.mxu0 0
    %154 = vmatpush1.bf16.msra.mxu0 0
    %155 = vmatprep.subr.bf16.mxu0 0
    %156 = vmatpush1.bf16.msra.mxu0 0
    %157 = vmatprep.mubr.bf16.mxu0 0
    %158 = vmatmul.mubr.bf16.gmra.mrb[0].mxu0 %v123
    %v159 = vpop.f32.mrb[0].mxu0
    %v160 = vadd.f32 %v94, %v159
    %v161 = vpop.f32.mrb[0].mxu0
    %v162 = vadd.f32 %v98, %v161
    %v163 = vpop.f32.mrb[0].mxu0
    %v164 = vpop.f32.mrb[0].mxu0
    %165 = vdwg.mxu0
    %v166 = vmul.f32 %v160, 0.5
    %v167 = vmul.f32 %v162, 0.5
    %v168 = vmul.f32 %v160, 0.70710677
    %v169 = vmul.f32 %v162, 0.70710677
    %v170 = verf.f32.pop %v168
    %v171 = verf.f32.pop %v169
    %v172 = vadd.f32 %v170, 1.0
    %v173 = vadd.f32 %v171, 1.0
    %v174 = vmul.f32 %v166, %v172
    %v175 = vmul.f32 %v167, %v173
    %v176 = vpack.c.bf16 %v174, %v174
    %v177 = vpack.c.bf16 %v175, %v175
    %v178 = vld [vmem:[#allocation7] sm:$0xf]
    %v179 = vld [vmem:[#allocation7 + $0x4] sm:$0xf]
    %v180 = vld [vmem:[#allocation7 + $0x8] sm:$0xf]
    %v181 = vld [vmem:[#allocation7 + $0xc] sm:$0xf]
    %v182 = vld [vmem:[#allocation7 + $0x10] sm:$0xf]
    %v183 = vld [vmem:[#allocation7 + $0x14] sm:$0xf]
    %v184 = vld [vmem:[#allocation7 + $0x18] sm:$0xf]
    %v185 = vld [vmem:[#allocation7 + $0x1c] sm:$0xf]
    %v186 = vld [vmem:[#allocation7 + $0x20] sm:$0xf]
    %v187 = vld [vmem:[#allocation7 + $0x24] sm:$0xf]
    %v188 = vld [vmem:[#allocation7 + $0x28] sm:$0xf]
    %v189 = vld [vmem:[#allocation7 + $0x2c] sm:$0xf]
    %v190 = vld [vmem:[#allocation7 + $0x30] sm:$0xf]
    %v191 = vld [vmem:[#allocation7 + $0x34] sm:$0xf]
    %v192 = vld [vmem:[#allocation7 + $0x38] sm:$0xf]
    %v193 = vld [vmem:[#allocation7 + $0x3c] sm:$0xf]
    %v194 = vld [vmem:[%s4] sm:$0x1]
    %v196 = vlaneseq
    %v197 = vshrl.u32 %v196, 7
    %v198 = vsub.s32 0, %v197
    %v199 = vrot.slane %v194, %v198
    %v217 = vunpack.c.l.b16 %v178
    %v218 = vunpack.c.l.b16 %v179
    %v219 = vunpack.c.l.b16 %v180
    %v220 = vunpack.c.l.b16 %v181
    %v221 = vunpack.c.l.b16 %v182
    %v222 = vunpack.c.l.b16 %v183
    %v223 = vunpack.c.l.b16 %v184
    %v224 = vunpack.c.l.b16 %v185
    %v225 = vunpack.c.l.b16 %v186
    %v226 = vunpack.c.l.b16 %v187
    %v227 = vunpack.c.l.b16 %v188
    %v228 = vunpack.c.l.b16 %v189
    %v229 = vunpack.c.l.b16 %v190
    %v230 = vunpack.c.l.b16 %v191
    %v231 = vunpack.c.l.b16 %v192
    %v232 = vunpack.c.l.b16 %v193
    %v233 = vpack.c.b16 %v218, %v217
    %v234 = vpack.c.b16 %v220, %v219
    %v235 = vpack.c.b16 %v222, %v221
    %v236 = vpack.c.b16 %v224, %v223
    %v237 = vpack.c.b16 %v226, %v225
    %v238 = vpack.c.b16 %v228, %v227
    %v239 = vpack.c.b16 %v230, %v229
    %v240 = vpack.c.b16 %v232, %v231
    %249 = vmatprep.subr.bf16.mxu0 0
    %250 = vmatpush1.bf16.msra.mxu0 %v233
    %251 = vmatprep.subr.bf16.mxu0 0
    %252 = vmatpush1.bf16.msra.mxu0 %v234
    %253 = vmatprep.subr.bf16.mxu0 0
    %254 = vmatpush1.bf16.msra.mxu0 %v235
    %255 = vmatprep.subr.bf16.mxu0 0
    %256 = vmatpush1.bf16.msra.mxu0 %v236
    %257 = vmatprep.subr.bf16.mxu0 0
    %258 = vmatpush1.bf16.msra.mxu0 %v237
    %259 = vmatprep.subr.bf16.mxu0 0
    %260 = vmatpush1.bf16.msra.mxu0 %v238
    %261 = vmatprep.subr.bf16.mxu0 0
    %262 = vmatpush1.bf16.msra.mxu0 %v239
    %263 = vmatprep.subr.bf16.mxu0 0
    %264 = vmatpush1.bf16.msra.mxu0 %v240
    %265 = vmatprep.subr.bf16.mxu0 0
    %266 = vmatpush1.bf16.msra.mxu0 0
    %267 = vmatprep.subr.bf16.mxu0 0
    %268 = vmatpush1.bf16.msra.mxu0 0
    %269 = vmatprep.subr.bf16.mxu0 0
    %270 = vmatpush1.bf16.msra.mxu0 0
    %271 = vmatprep.subr.bf16.mxu0 0
    %272 = vmatpush1.bf16.msra.mxu0 0
    %273 = vmatprep.subr.bf16.mxu0 0
    %274 = vmatpush1.bf16.msra.mxu0 0
    %275 = vmatprep.subr.bf16.mxu0 0
    %276 = vmatpush1.bf16.msra.mxu0 0
    %277 = vmatprep.subr.bf16.mxu0 0
    %278 = vmatpush1.bf16.msra.mxu0 0
    %279 = vmatprep.subr.bf16.mxu0 0
    %280 = vmatpush1.bf16.msra.mxu0 0
    %281 = vmatprep.mubr.bf16.mxu0 0
    %282 = vmatmul.mubr.bf16.gmra.mrb[0].mxu0 %v176
    %v283 = vpop.f32.mrb[0].mxu0
    %v284 = vadd.f32 %v199, %v283
    %v285 = vpop.f32.mrb[0].mxu0
    %v286 = vpop.f32.mrb[0].mxu0
    %v287 = vpop.f32.mrb[0].mxu0
    %288 = vdwg.mxu0
    %289 = vmax.xlane.f32.xlu0 %v284
    %v290 = vpop.xlane.xlu0 %289
    %v291 = vsub.f32 %v284, %v290
    %v292 = vmul.f32 %v291, 1.442695
    %v293 = vpow.pop %v292
    %294 = vadd.xlane.f32.xlu0 %v293
    %v295 = vpop.xlane.xlu0 %294
    %v296 = vrcp.pop %v295
    %v297 = vmul.f32 %v293, %v296
    %v298 = vld [vmem:[#allocation8] sm:$0xf]
    %v299 = vld [vmem:[#allocation8 + $0x4] sm:$0xf]
    %v300 = vld [vmem:[#allocation8 + $0x8] sm:$0xf]
    %v301 = vld [vmem:[#allocation8 + $0xc] sm:$0xf]
    %v302 = vld [vmem:[#allocation8 + $0x10] sm:$0xf]
    %v303 = vld [vmem:[#allocation8 + $0x14] sm:$0xf]
    %v304 = vld [vmem:[#allocation8 + $0x18] sm:$0xf]
    %v305 = vld [vmem:[#allocation8 + $0x1c] sm:$0xf]
    %v306 = vld [vmem:[#allocation8 + $0x20] sm:$0xf]
    %v307 = vld [vmem:[#allocation8 + $0x24] sm:$0xf]
    %v308 = vld [vmem:[#allocation8 + $0x28] sm:$0xf]
    %v309 = vld [vmem:[#allocation8 + $0x2c] sm:$0xf]
    %v310 = vld [vmem:[#allocation8 + $0x30] sm:$0xf]
    %v311 = vld [vmem:[#allocation8 + $0x34] sm:$0xf]
    %v312 = vld [vmem:[#allocation8 + $0x38] sm:$0xf]
    %v313 = vld [vmem:[#allocation8 + $0x3c] sm:$0xf]
    %v314 = vld [vmem:[%s6] sm:$0x1]
    %v316 = vlaneseq
    %v317 = vshrl.u32 %v316, 7
    %v318 = vsub.s32 0, %v317
    %v319 = vrot.slane %v314, %v318
    %v337 = vunpack.c.l.b16 %v298
    %v338 = vunpack.c.l.b16 %v299
    %v339 = vunpack.c.l.b16 %v300
    %v340 = vunpack.c.l.b16 %v301
    %v341 = vunpack.c.l.b16 %v302
    %v342 = vunpack.c.l.b16 %v303
    %v343 = vunpack.c.l.b16 %v304
    %v344 = vunpack.c.l.b16 %v305
    %v345 = vunpack.c.l.b16 %v306
    %v346 = vunpack.c.l.b16 %v307
    %v347 = vunpack.c.l.b16 %v308
    %v348 = vunpack.c.l.b16 %v309
    %v349 = vunpack.c.l.b16 %v310
    %v350 = vunpack.c.l.b16 %v311
    %v351 = vunpack.c.l.b16 %v312
    %v352 = vunpack.c.l.b16 %v313
    %v353 = vpack.c.b16 %v338, %v337
    %v354 = vpack.c.b16 %v340, %v339
    %v355 = vpack.c.b16 %v342, %v341
    %v356 = vpack.c.b16 %v344, %v343
    %v357 = vpack.c.b16 %v346, %v345
    %v358 = vpack.c.b16 %v348, %v347
    %v359 = vpack.c.b16 %v350, %v349
    %v360 = vpack.c.b16 %v352, %v351
    %369 = vmatprep.subr.bf16.mxu0 0
    %370 = vmatpush1.bf16.msra.mxu0 %v353
    %371 = vmatprep.subr.bf16.mxu0 0
    %372 = vmatpush1.bf16.msra.mxu0 %v354
    %373 = vmatprep.subr.bf16.mxu0 0
    %374 = vmatpush1.bf16.msra.mxu0 %v355
    %375 = vmatprep.subr.bf16.mxu0 0
    %376 = vmatpush1.bf16.msra.mxu0 %v356
    %377 = vmatprep.subr.bf16.mxu0 0
    %378 = vmatpush1.bf16.msra.mxu0 %v357
    %379 = vmatprep.subr.bf16.mxu0 0
    %380 = vmatpush1.bf16.msra.mxu0 %v358
    %381 = vmatprep.subr.bf16.mxu0 0
    %382 = vmatpush1.bf16.msra.mxu0 %v359
    %383 = vmatprep.subr.bf16.mxu0 0
    %384 = vmatpush1.bf16.msra.mxu0 %v360
    %385 = vmatprep.subr.bf16.mxu0 0
    %386 = vmatpush1.bf16.msra.mxu0 0
    %387 = vmatprep.subr.bf16.mxu0 0
    %388 = vmatpush1.bf16.msra.mxu0 0
    %389 = vmatprep.subr.bf16.mxu0 0
    %390 = vmatpush1.bf16.msra.mxu0 0
    %391 = vmatprep.subr.bf16.mxu0 0
    %392 = vmatpush1.bf16.msra.mxu0 0
    %393 = vmatprep.subr.bf16.mxu0 0
    %394 = vmatpush1.bf16.msra.mxu0 0
    %395 = vmatprep.subr.bf16.mxu0 0
    %396 = vmatpush1.bf16.msra.mxu0 0
    %397 = vmatprep.subr.bf16.mxu0 0
    %398 = vmatpush1.bf16.msra.mxu0 0
    %399 = vmatprep.subr.bf16.mxu0 0
    %400 = vmatpush1.bf16.msra.mxu0 0
    %401 = vmatprep.mubr.bf16.mxu0 0
    %402 = vmatmul.mubr.bf16.gmra.mrb[0].mxu0 %v177
    %v403 = vpop.f32.mrb[0].mxu0
    %v404 = vadd.f32 %v319, %v403
    %v405 = vpop.f32.mrb[0].mxu0
    %v406 = vpop.f32.mrb[0].mxu0
    %v407 = vpop.f32.mrb[0].mxu0
    %408 = vdwg.mxu0
    %v409 = vmul.f32 %v404, %v297
    %410 = vadd.xlane.f32.xlu0 %v409
    %v411 = vpop.xlane.xlu0 %410
    %412 = vst [vmem:[#allocation10] sm:$0xff] %v411
    %413 = vst [vmem:[#allocation11] sm:$0xff] %v297
    // Predicated region
    $region46: #{tpu_custom_call.1} parent=1 // pred_check
      _
    $region47: #{tpu_custom_call.1} parent=1 // pred_check_branch
      %415 = sbr.rel (0) target = $region49
    $region48: #{tpu_custom_call.1} parent=1 // pred_region
      %s417 = ssub.s32 128, 128
      %418 = vsyncadd [#allocation4], %s417
      %s420 = sshll.u32 [#allocation10], 4
      %s421 = int_to_ptr.vmem [resolvable:$true] %s420
      %423 = dma.vmem_to_hbm [thread:$0]  %s421, 128, %s7, [#allocation4]
    $region49: #{tpu_custom_call.1} parent=1 // pred_fallthru
      _
    // Predicated region
    $region50: #{tpu_custom_call.1} parent=1 // pred_check
      _
    $region51: #{tpu_custom_call.1} parent=1 // pred_check_branch
      %425 = sbr.rel (0) target = $region53
    $region52: #{tpu_custom_call.1} parent=1 // pred_region
      %s427 = ssub.s32 128, 128
      %428 = vsyncadd [#allocation12], %s427
      %s430 = sshll.u32 [#allocation11], 4
      %s431 = int_to_ptr.vmem [resolvable:$true] %s430
      %433 = dma.vmem_to_hbm [thread:$0]  %s431, 128, %s8, [#allocation12]
    $region53: #{tpu_custom_call.1} parent=1 // pred_fallthru
      _
    // Predicated region
    $region54: #{tpu_custom_call.1} parent=1 // pred_check
      _
    $region55: #{tpu_custom_call.1} parent=1 // pred_check_branch
      %435 = sbr.rel (0) target = $region57
    $region56: #{tpu_custom_call.1} parent=1 // pred_region
      %436 = dma.done [#allocation4], 128
    $region57: #{tpu_custom_call.1} parent=1 // pred_fallthru
      _
    // Predicated region
    $region58: #{tpu_custom_call.1} parent=1 // pred_check
      _
    $region59: #{tpu_custom_call.1} parent=1 // pred_check_branch
      %438 = sbr.rel (0) target = $region61
    $region60: #{tpu_custom_call.1} parent=1 // pred_region
      %439 = dma.done [#allocation12], 128
    $region61: #{tpu_custom_call.1} parent=1 // pred_fallthru
      _
    %440 = vsyncpa [#allocation3], 1
    %441 = vsyncpa [#allocation6], 1
    %442 = vsyncpa [#allocation9], 1
    %443 = vsyncpa [#allocation4], 1
    %444 = vsyncpa [#allocation12], 1

</llo_original>
